<compile_context>
chip_gen: v5e
topology: v5e:2x2
jax: 0.10.0
libtpu: 0.0.40
codegen_flags: <defaults>
</compile_context>

<pallas_src>
import math

import jax
import jax.numpy as jnp
from jax.experimental import pallas as pl
from jax.experimental.pallas import tpu as pltpu


# --------------------------------------------------------------------------
# VMEM-budget tile selection
# --------------------------------------------------------------------------

def _vmem_capacity_bytes():
    try:
        return int(pltpu.get_tpu_info().vmem_capacity_bytes)
    except Exception:
        return 64 * 1024 * 1024          # v7x-safe fallback


def _pick_tiles(N, C, L, vmem_limit):
    """Choose (Nb, Lt): batch-block and lane-tile sizes from a VMEM budget."""
    # Per L-column cost model: double-buffered f32 in + f32 out streams plus
    # ~3 f32 (C, Lt) intermediates  ->  ~28*C bytes per column of tile.
    per_col = 28 * C
    budget = vmem_limit // 2             # headroom for compiler scratch
    max_cols = max(budget // per_col, 128)
    max_cols = min(max_cols, max((4 << 20) // (4 * C), 128))   # <=4 MiB x slab
    if L <= max_cols:
        lt = L                           # full axis (full-dim (8,128) escape)
        nb = max(1, min(N, max_cols // max(L, 1), 8))  # 8: in-kernel unroll cap
        while N % nb:                    # keep Nb a divisor of N (no row mask)
            nb -= 1
    else:
        lt = max((max_cols // 128) * 128, 128)         # lane-aligned tile
        nb = 1
    return nb, lt


def _affine(s, q, g, b, cnt, eps):
    """Per-channel BN scale/shift from partial (split, C, 1) sums / sum-sqs."""
    ssum = jnp.sum(s, axis=0)[:, 0]
    ssq = jnp.sum(q, axis=0)[:, 0]
    m = ssum / cnt
    v = jnp.maximum(ssq / cnt - m * m, 0.0)   # clamp: one-pass var can go < 0
    scale = g.astype(jnp.float32) / jnp.sqrt(v + eps)
    shift = b.astype(jnp.float32) - m * scale
    return scale, shift


# --------------------------------------------------------------------------
# Forward
# --------------------------------------------------------------------------

def basic_block_3x3(x, params, *, stride=1, training=True,
                    running_stats=None, eps=1e-5, out_dtype=jnp.float32):
    """BasicBlock3x3 forward.

    x: (N, C, L) float32 (PyTorch Conv1d layout).
    params = (w1, g1, b1, w2, g2, b2); w*: (C, C, 1) Conv1d weights.
    training=True  -> BatchNorm1d uses batch statistics (fresh-module default).
    training=False -> running_stats = (rm1, rv1, rm2, rv2), each (C,).
    """
    w1, g1, b1, w2, g2, b2 = params
    N, Cin, L = x.shape
    Cout = w1.shape[0]
    assert w1.shape == (Cout, Cin, 1) and w2.shape == (Cout, Cout, 1)
    assert Cin == Cout, "downsample=None requires matching channel counts"
    assert stride == 1, "stride>1 needs a downsample branch (None here)"
    # TODO(synk): optional `downsample` submodule (needed for stride>1 or a
    # channel change) is None in this block config; BatchNorm running-stat
    # (momentum) buffer updates are a training side effect not produced here.

    x = x.astype(jnp.float32)
    w1_f = w1[:, :, 0].astype(jnp.float32)           # (Cout, Cin)
    w2_f = w2[:, :, 0].astype(jnp.float32)

    vmem_cap = _vmem_capacity_bytes()
    vmem_limit = min((vmem_cap * 3) // 4, 100 * 1024 * 1024)

    Nb, Lt = _pick_tiles(N, Cin, L, vmem_limit)
    NB = N // Nb                                      # batch blocks
    nlt = -(-L // Lt)                                 # L tiles (cdiv)
    split = 2 if nlt >= 2 else 1                      # stats split across TCs
    ltpc = -(-nlt // split)                           # L tiles per core-slice
    need_mask = (L % Lt != 0) or (split * ltpc != nlt)

    cnt = float(N * L)

    cparams_stats = pltpu.CompilerParams(
        dimension_semantics=("parallel", "arbitrary", "arbitrary"),
        vmem_limit_bytes=vmem_limit)
    cparams_apply = pltpu.CompilerParams(
        dimension_semantics=("parallel", "parallel"),
        vmem_limit_bytes=vmem_limit)

    # ---- BlockSpecs ------------------------------------------------------
    # Stats grid: (split, N-blocks, L-tiles-per-core).  Dummy tiles (odd tile
    # count) clamp to the last real block and are masked out in-kernel.
    def _x_map_s(c, n, t):
        return (n, 0, jnp.minimum(c * ltpc + t, nlt - 1))

    x_spec_s = pl.BlockSpec((Nb, Cin, Lt), _x_map_s)
    w_spec_s = pl.BlockSpec((Cout, Cin), lambda c, n, t: (0, 0))
    vec_spec_s = pl.BlockSpec((Cout, 1), lambda c, n, t: (0, 0))
    stat_spec = pl.BlockSpec((1, Cout, 1), lambda c, n, t: (c, 0, 0))
    stat_shape = jax.ShapeDtypeStruct((split, Cout, 1), jnp.float32)

    # Apply grid: pure map, fully parallel.
    x_spec_a = pl.BlockSpec((Nb, Cin, Lt), lambda n, l: (n, 0, l))
    o_spec_a = pl.BlockSpec((Nb, Cout, Lt), lambda n, l: (n, 0, l))
    w_spec_a = pl.BlockSpec((Cout, Cin), lambda n, l: (0, 0))
    vec_spec_a = pl.BlockSpec((Cout, 1), lambda n, l: (0, 0))

    # ---- Kernels ---------------------------------------------------------
    def _lane_mask():
        gt = pl.program_id(0) * ltpc + pl.program_id(2)        # global L-tile
        pos = gt * Lt + jax.lax.broadcasted_iota(jnp.int32, (1, Lt), 1)
        return pos < L

    def _pass1_kernel(x_ref, w1_ref, xb_ref, s_ref, q_ref):
        n = pl.program_id(1)
        t = pl.program_id(2)

        @pl.when(jnp.logical_and(n == 0, t == 0))
        def _():
            s_ref[...] = jnp.zeros(s_ref.shape, s_ref.dtype)
            q_ref[...] = jnp.zeros(q_ref.shape, q_ref.dtype)

        if need_mask:
            mask = _lane_mask()
        s = jnp.zeros((Cout, 1), jnp.float32)
        q = jnp.zeros((Cout, 1), jnp.float32)
        w1b = w1_ref[...]
        for nb in range(Nb):
            xb = x_ref[nb].astype(jnp.bfloat16)                # (Cin, Lt)
            xb_ref[nb] = xb                                    # bf16 x copy
            y1 = jnp.dot(w1b, xb, preferred_element_type=jnp.float32)
            if need_mask:
                y1 = jnp.where(mask, y1, 0.0)
            s = s + jnp.sum(y1, axis=1, keepdims=True)
            q = q + jnp.sum(y1 * y1, axis=1, keepdims=True)
        s_ref[0] += s
        q_ref[0] += q

    def _pass2_kernel(xb_ref, w1f_ref, sh1_ref, w2_ref, s_ref, q_ref):
        n = pl.program_id(1)
        t = pl.program_id(2)

        @pl.when(jnp.logical_and(n == 0, t == 0))
        def _():
            s_ref[...] = jnp.zeros(s_ref.shape, s_ref.dtype)
            q_ref[...] = jnp.zeros(q_ref.shape, q_ref.dtype)

        if need_mask:
            mask = _lane_mask()
        s = jnp.zeros((Cout, 1), jnp.float32)
        q = jnp.zeros((Cout, 1), jnp.float32)
        w1b = w1f_ref[...]
        w2b = w2_ref[...]
        sh1 = sh1_ref[...]
        for nb in range(Nb):
            xb = xb_ref[nb]                                    # bf16 (Cin, Lt)
            y1 = jnp.dot(w1b, xb, preferred_element_type=jnp.float32)
            h = jnp.maximum(y1 + sh1, 0.0)                     # bn1 (scale folded)
            y2 = jnp.dot(w2b, h.astype(jnp.bfloat16),
                         preferred_element_type=jnp.float32)
            if need_mask:
                y2 = jnp.where(mask, y2, 0.0)
            s = s + jnp.sum(y2, axis=1, keepdims=True)
            q = q + jnp.sum(y2 * y2, axis=1, keepdims=True)
        s_ref[0] += s
        q_ref[0] += q

    def _apply_kernel(x_ref, w1f_ref, sh1_ref, w2f_ref, sh2_ref, o_ref):
        w1b = w1f_ref[...]
        w2b = w2f_ref[...]
        sh1 = sh1_ref[...]
        sh2 = sh2_ref[...]
        for nb in range(Nb):
            xt = x_ref[nb]                         # bf16 (train) / f32 (eval)
            y1 = jnp.dot(w1b, xt.astype(jnp.bfloat16),
                         preferred_element_type=jnp.float32)
            h = jnp.maximum(y1 + sh1, 0.0)
            y2 = jnp.dot(w2b, h.astype(jnp.bfloat16),
                         preferred_element_type=jnp.float32)
            o_ref[nb] = jnp.maximum(y2 + sh2 + xt.astype(jnp.float32),
                                    0.0).astype(o_ref.dtype)

    # ---- Passes ----------------------------------------------------------
    if training:
        w1b = w1_f.astype(jnp.bfloat16)
        w2b = w2_f.astype(jnp.bfloat16)

        xb16, s1, q1 = pl.pallas_call(
            _pass1_kernel,
            out_shape=(jax.ShapeDtypeStruct((N, Cin, L), jnp.bfloat16),
                       stat_shape, stat_shape),
            grid=(split, NB, ltpc),
            in_specs=[x_spec_s, w_spec_s],
            out_specs=(x_spec_s, stat_spec, stat_spec),
            compiler_params=cparams_stats,
        )(x, w1b)
        sc1, sh1 = _affine(s1, q1, g1, b1, cnt, eps)
        w1f = (sc1[:, None] * w1_f).astype(jnp.bfloat16)       # fold bn1 scale
        sh1c = sh1.reshape(Cout, 1)

        s2, q2 = pl.pallas_call(
            _pass2_kernel,
            out_shape=(stat_shape, stat_shape),
            grid=(split, NB, ltpc),
            in_specs=[x_spec_s, w_spec_s, vec_spec_s, w_spec_s],
            out_specs=(stat_spec, stat_spec),
            compiler_params=cparams_stats,
        )(xb16, w1f, sh1c, w2b)
        sc2, sh2 = _affine(s2, q2, g2, b2, cnt, eps)
        w2f = (sc2[:, None] * w2_f).astype(jnp.bfloat16)       # fold bn2 scale
        sh2c = sh2.reshape(Cout, 1)

        x_apply = xb16            # bf16 x: halves the read of the apply sweep
    else:
        rm1, rv1, rm2, rv2 = running_stats
        sc1 = g1.astype(jnp.float32) / jnp.sqrt(rv1.astype(jnp.float32) + eps)
        sh1c = (b1 - rm1 * sc1).astype(jnp.float32).reshape(Cout, 1)
        sc2 = g2.astype(jnp.float32) / jnp.sqrt(rv2.astype(jnp.float32) + eps)
        sh2c = (b2 - rm2 * sc2).astype(jnp.float32).reshape(Cout, 1)
        w1f = (sc1[:, None] * w1_f).astype(jnp.bfloat16)
        w2f = (sc2[:, None] * w2_f).astype(jnp.bfloat16)
        x_apply = x               # f32 x: exact residual in eval mode

    out = pl.pallas_call(
        _apply_kernel,
        out_shape=jax.ShapeDtypeStruct((N, Cout, L), out_dtype),
        grid=(NB, nlt),
        in_specs=[x_spec_a, w_spec_a, vec_spec_a, w_spec_a, vec_spec_a],
        out_specs=o_spec_a,
        compiler_params=cparams_apply,
    )(x_apply, w1f, sh1c, w2f, sh2c)
    return out


# --------------------------------------------------------------------------
# Pure-JAX references (f32, HIGHEST precision) mirroring the PyTorch forward
# --------------------------------------------------------------------------

def _conv1x1(y, w):
    return jnp.einsum("oc,ncl->nol", w[:, :, 0], y,
                      precision=jax.lax.Precision.HIGHEST)


def _reference_train(x, w1, g1, b1, w2, g2, b2, eps=1e-5):
    def bn(y, g, b):
        m = jnp.mean(y, axis=(0, 2), keepdims=True)
        v = jnp.mean((y - m) ** 2, axis=(0, 2), keepdims=True)
        return (g.reshape(1, -1, 1) * (y - m) / jnp.sqrt(v + eps)
                + b.reshape(1, -1, 1))
    out = jax.nn.relu(bn(_conv1x1(x, w1), g1, b1))
    out = bn(_conv1x1(out, w2), g2, b2)
    return jax.nn.relu(out + x)


def _reference_eval(x, w1, g1, b1, w2, g2, b2, rm1, rv1, rm2, rv2, eps=1e-5):
    def bn(y, g, b, m, v):
        return (g.reshape(1, -1, 1) * (y - m.reshape(1, -1, 1))
                / jnp.sqrt(v.reshape(1, -1, 1) + eps) + b.reshape(1, -1, 1))
    out = jax.nn.relu(bn(_conv1x1(x, w1), g1, b1, rm1, rv1))
    out = bn(_conv1x1(out, w2), g2, b2, rm2, rv2)
    return jax.nn.relu(out + x)


if __name__ == "__main__":
    N, C, L = 2, 4, 16
    key = jax.random.PRNGKey(0)
    kx, k1, k2, k3, k4, k5, k6 = jax.random.split(key, 7)

    x = jax.random.normal(kx, (N, C, L), jnp.float32)
    bound = 1.0 / math.sqrt(C * 1)                 # Conv1d default init (k=1)
    w1 = jax.random.uniform(k1, (C, C, 1), jnp.float32, -bound, bound)
    w2 = jax.random.uniform(k2, (C, C, 1), jnp.float32, -bound, bound)
    g1 = 1.0 + 0.1 * jax.random.normal(k3, (C,), jnp.float32)
    b1 = 0.1 * jax.random.normal(k4, (C,), jnp.float32)
    g2 = jnp.ones((C,), jnp.float32)               # BatchNorm1d defaults
    b2 = jnp.zeros((C,), jnp.float32)
    params = (w1, g1, b1, w2, g2, b2)

    # Training-mode BN (fresh PyTorch module default).
    out = jax.block_until_ready(basic_block_3x3(x, params, training=True))
    ref = _reference_train(x, *params)
    assert out.shape == ref.shape == (N, C, L), (out.shape, ref.shape)
    # Kernel uses bf16 MXU operands, bf16-folded BN weights and (in training)
    # a bf16 residual path; reference is f32 HIGHEST -> allow ~1-2% tolerance.
    err = float(jnp.max(jnp.abs(out - ref)))
    assert jnp.allclose(out, ref, atol=4e-2, rtol=4e-2), err

    # Eval-mode BN (running stats) -> single fused pallas_call, f32 residual.
    rm1 = 0.1 * jax.random.normal(k5, (C,), jnp.float32)
    rv1 = jax.random.uniform(k6, (C,), jnp.float32, 0.5, 1.5)
    rm2 = jnp.zeros((C,), jnp.float32)
    rv2 = jnp.ones((C,), jnp.float32)
    out_e = jax.block_until_ready(
        basic_block_3x3(x, params, training=False,
                        running_stats=(rm1, rv1, rm2, rv2)))
    ref_e = _reference_eval(x, *params, rm1, rv1, rm2, rv2)
    err_e = float(jnp.max(jnp.abs(out_e - ref_e)))
    assert jnp.allclose(out_e, ref_e, atol=4e-2, rtol=4e-2), err_e

    print("KERNEL_OK")
</pallas_src>

<mosaic_0001>
module attributes {stable_mosaic.version = 11 : i64} {
  func.func @_pass1_kernel(%arg0: i32, %arg1: i32, %arg2: i32, %arg3: memref<2x4x16xf32, #tpu.memory_space<vmem>>, %arg4: memref<4x4xbf16, #tpu.memory_space<vmem>>, %arg5: memref<2x4x16xbf16, #tpu.memory_space<vmem>>, %arg6: memref<1x4x1xf32, #tpu.memory_space<vmem>>, %arg7: memref<1x4x1xf32, #tpu.memory_space<vmem>>) attributes {dimension_semantics = [#tpu.dimension_semantics<parallel>, #tpu.dimension_semantics<arbitrary>, #tpu.dimension_semantics<arbitrary>], iteration_bounds = array<i64: 1, 1, 1>, scalar_prefetch = 0 : i64, scratch_operands = 0 : i64, tpu.core_type = #tpu.core_type<tc>, window_params = [{transform_indices = @transform_0, window_bounds = array<i64: 2, 4, 16>}, {pipeline_mode = #tpu.pipeline_mode<synchronous>, transform_indices = @transform_1, window_bounds = array<i64: 4, 4>}, {transform_indices = @transform_2, window_bounds = array<i64: 2, 4, 16>}, {transform_indices = @transform_3, window_bounds = array<i64: 1, 4, 1>}, {transform_indices = @transform_4, window_bounds = array<i64: 1, 4, 1>}]} {
    %c0_i32 = arith.constant 0 : i32
    %0 = arith.cmpi eq, %arg1, %c0_i32 : i32
    %c0_i32_0 = arith.constant 0 : i32
    %1 = arith.cmpi eq, %arg2, %c0_i32_0 : i32
    %2 = arith.andi %0, %1 : i1
    %3 = arith.extui %2 : i1 to i32
    %c0_i32_1 = arith.constant 0 : i32
    %4 = arith.cmpi ne, %3, %c0_i32_1 : i32
    scf.if %4 {
      %cst_33 = arith.constant 0.000000e+00 : f32
      %48 = vector.broadcast %cst_33 : f32 to vector<1x4x1xf32>
      %c0_34 = arith.constant 0 : index
      %c0_35 = arith.constant 0 : index
      %c0_36 = arith.constant 0 : index
      %49 = vector.load %arg6[%c0_34, %c0_35, %c0_36] : memref<1x4x1xf32, #tpu.memory_space<vmem>>, vector<1x4x1xf32>
      tpu.vector_store %arg6[%c0_34, %c0_35, %c0_36], %48 {strides = array<i32>} : memref<1x4x1xf32, #tpu.memory_space<vmem>>, vector<1x4x1xf32>,
      %cst_37 = arith.constant 0.000000e+00 : f32
      %50 = vector.broadcast %cst_37 : f32 to vector<1x4x1xf32>
      %c0_38 = arith.constant 0 : index
      %c0_39 = arith.constant 0 : index
      %c0_40 = arith.constant 0 : index
      %51 = vector.load %arg7[%c0_38, %c0_39, %c0_40] : memref<1x4x1xf32, #tpu.memory_space<vmem>>, vector<1x4x1xf32>
      tpu.vector_store %arg7[%c0_38, %c0_39, %c0_40], %50 {strides = array<i32>} : memref<1x4x1xf32, #tpu.memory_space<vmem>>, vector<1x4x1xf32>,
    } else {
    }
    %cst = arith.constant 0.000000e+00 : f32
    %5 = vector.broadcast %cst : f32 to vector<4x1xf32>
    %cst_2 = arith.constant 0.000000e+00 : f32
    %6 = vector.broadcast %cst_2 : f32 to vector<4x1xf32>
    %c0 = arith.constant 0 : index
    %c0_3 = arith.constant 0 : index
    %7 = vector.load %arg4[%c0, %c0_3] : memref<4x4xbf16, #tpu.memory_space<vmem>>, vector<4x4xbf16>
    %c0_4 = arith.constant 0 : index
    %c0_5 = arith.constant 0 : index
    %c0_6 = arith.constant 0 : index
    %8 = vector.load %arg3[%c0_4, %c0_5, %c0_6] : memref<2x4x16xf32, #tpu.memory_space<vmem>>, vector<1x4x16xf32>
    %9 = vector.shape_cast %8 : vector<1x4x16xf32> to vector<4x16xf32>
    %10 = arith.truncf %9 : vector<4x16xf32> to vector<4x16xbf16>
    %c0_7 = arith.constant 0 : index
    %c0_8 = arith.constant 0 : index
    %c0_9 = arith.constant 0 : index
    %11 = vector.load %arg5[%c0_7, %c0_8, %c0_9] : memref<2x4x16xbf16, #tpu.memory_space<vmem>>, vector<1x4x16xbf16>
    %12 = vector.shape_cast %11 : vector<1x4x16xbf16> to vector<4x16xbf16>
    %13 = vector.shape_cast %10 : vector<4x16xbf16> to vector<1x4x16xbf16>
    tpu.vector_store %arg5[%c0_7, %c0_8, %c0_9], %13 {strides = array<i32>} : memref<2x4x16xbf16, #tpu.memory_space<vmem>>, vector<1x4x16xbf16>,
    %cst_10 = arith.constant dense<0.000000e+00> : vector<4x16xf32>
    %14 = tpu.matmul %7, %10, %cst_10 {dimension_numbers = #tpu.dot_dimension_numbers<[1], [0], [0], [1], [0, 0, 1, 1], [], []>} : vector<4x4xbf16>, vector<4x16xbf16>, vector<4x16xf32> -> vector<4x16xf32>
    %cst_11 = arith.constant dense<0.000000e+00> : vector<4xf32>
    %15 = vector.multi_reduction <add>, %14, %cst_11 [1] : vector<4x16xf32> to vector<4xf32>
    %16 = vector.shape_cast %15 : vector<4xf32> to vector<4x1xf32>
    %17 = arith.addf %5, %16 : vector<4x1xf32>
    %18 = arith.mulf %14, %14 : vector<4x16xf32>
    %cst_12 = arith.constant dense<0.000000e+00> : vector<4xf32>
    %19 = vector.multi_reduction <add>, %18, %cst_12 [1] : vector<4x16xf32> to vector<4xf32>
    %20 = vector.shape_cast %19 : vector<4xf32> to vector<4x1xf32>
    %21 = arith.addf %6, %20 : vector<4x1xf32>
    %c1 = arith.constant 1 : index
    %c0_13 = arith.constant 0 : index
    %c0_14 = arith.constant 0 : index
    %22 = vector.load %arg3[%c1, %c0_13, %c0_14] : memref<2x4x16xf32, #tpu.memory_space<vmem>>, vector<1x4x16xf32>
    %23 = vector.shape_cast %22 : vector<1x4x16xf32> to vector<4x16xf32>
    %24 = arith.truncf %23 : vector<4x16xf32> to vector<4x16xbf16>
    %c1_15 = arith.constant 1 : index
    %c0_16 = arith.constant 0 : index
    %c0_17 = arith.constant 0 : index
    %25 = vector.load %arg5[%c1_15, %c0_16, %c0_17] : memref<2x4x16xbf16, #tpu.memory_space<vmem>>, vector<1x4x16xbf16>
    %26 = vector.shape_cast %25 : vector<1x4x16xbf16> to vector<4x16xbf16>
    %27 = vector.shape_cast %24 : vector<4x16xbf16> to vector<1x4x16xbf16>
    tpu.vector_store %arg5[%c1_15, %c0_16, %c0_17], %27 {strides = array<i32>} : memref<2x4x16xbf16, #tpu.memory_space<vmem>>, vector<1x4x16xbf16>,
    %cst_18 = arith.constant dense<0.000000e+00> : vector<4x16xf32>
    %28 = tpu.matmul %7, %24, %cst_18 {dimension_numbers = #tpu.dot_dimension_numbers<[1], [0], [0], [1], [0, 0, 1, 1], [], []>} : vector<4x4xbf16>, vector<4x16xbf16>, vector<4x16xf32> -> vector<4x16xf32>
    %cst_19 = arith.constant dense<0.000000e+00> : vector<4xf32>
    %29 = vector.multi_reduction <add>, %28, %cst_19 [1] : vector<4x16xf32> to vector<4xf32>
    %30 = vector.shape_cast %29 : vector<4xf32> to vector<4x1xf32>
    %31 = arith.addf %17, %30 : vector<4x1xf32>
    %32 = arith.mulf %28, %28 : vector<4x16xf32>
    %cst_20 = arith.constant dense<0.000000e+00> : vector<4xf32>
    %33 = vector.multi_reduction <add>, %32, %cst_20 [1] : vector<4x16xf32> to vector<4xf32>
    %34 = vector.shape_cast %33 : vector<4xf32> to vector<4x1xf32>
    %35 = arith.addf %21, %34 : vector<4x1xf32>
    %c0_21 = arith.constant 0 : index
    %c0_22 = arith.constant 0 : index
    %c0_23 = arith.constant 0 : index
    %36 = vector.load %arg6[%c0_21, %c0_22, %c0_23] : memref<1x4x1xf32, #tpu.memory_space<vmem>>, vector<1x4x1xf32>
    %37 = vector.shape_cast %36 : vector<1x4x1xf32> to vector<4x1xf32>
    %38 = arith.addf %37, %31 : vector<4x1xf32>
    %c0_24 = arith.constant 0 : index
    %c0_25 = arith.constant 0 : index
    %c0_26 = arith.constant 0 : index
    %39 = vector.load %arg6[%c0_24, %c0_25, %c0_26] : memref<1x4x1xf32, #tpu.memory_space<vmem>>, vector<1x4x1xf32>
    %40 = vector.shape_cast %39 : vector<1x4x1xf32> to vector<4x1xf32>
    %41 = vector.shape_cast %38 : vector<4x1xf32> to vector<1x4x1xf32>
    tpu.vector_store %arg6[%c0_24, %c0_25, %c0_26], %41 {strides = array<i32>} : memref<1x4x1xf32, #tpu.memory_space<vmem>>, vector<1x4x1xf32>,
    %c0_27 = arith.constant 0 : index
    %c0_28 = arith.constant 0 : index
    %c0_29 = arith.constant 0 : index
    %42 = vector.load %arg7[%c0_27, %c0_28, %c0_29] : memref<1x4x1xf32, #tpu.memory_space<vmem>>, vector<1x4x1xf32>
    %43 = vector.shape_cast %42 : vector<1x4x1xf32> to vector<4x1xf32>
    %44 = arith.addf %43, %35 : vector<4x1xf32>
    %c0_30 = arith.constant 0 : index
    %c0_31 = arith.constant 0 : index
    %c0_32 = arith.constant 0 : index
    %45 = vector.load %arg7[%c0_30, %c0_31, %c0_32] : memref<1x4x1xf32, #tpu.memory_space<vmem>>, vector<1x4x1xf32>
    %46 = vector.shape_cast %45 : vector<1x4x1xf32> to vector<4x1xf32>
    %47 = vector.shape_cast %44 : vector<4x1xf32> to vector<1x4x1xf32>
    tpu.vector_store %arg7[%c0_30, %c0_31, %c0_32], %47 {strides = array<i32>} : memref<1x4x1xf32, #tpu.memory_space<vmem>>, vector<1x4x1xf32>,
    return
  }
  func.func @transform_0(%arg0: i32, %arg1: i32, %arg2: i32) -> (i32, i32, i32) {
    %c1_i32 = arith.constant 1 : i32
    %0 = arith.muli %arg0, %c1_i32 : i32
    %1 = arith.addi %0, %arg2 : i32
    %c0_i32 = arith.constant 0 : i32
    %2 = arith.minsi %1, %c0_i32 : i32
    %c0_i32_0 = arith.constant 0 : i32
    %c0_i32_1 = arith.constant 0 : i32
    return %arg1, %c0_i32_0, %2 : i32, i32, i32
  }
  func.func @transform_1(%arg0: i32, %arg1: i32, %arg2: i32) -> (i32, i32) {
    %c0_i32 = arith.constant 0 : i32
    %c0_i32_0 = arith.constant 0 : i32
    %c0_i32_1 = arith.constant 0 : i32
    return %c0_i32, %c0_i32_0 : i32, i32
  }
  func.func @transform_2(%arg0: i32, %arg1: i32, %arg2: i32) -> (i32, i32, i32) {
    %c1_i32 = arith.constant 1 : i32
    %0 = arith.muli %arg0, %c1_i32 : i32
    %1 = arith.addi %0, %arg2 : i32
    %c0_i32 = arith.constant 0 : i32
    %2 = arith.minsi %1, %c0_i32 : i32
    %c0_i32_0 = arith.constant 0 : i32
    %c0_i32_1 = arith.constant 0 : i32
    return %arg1, %c0_i32_0, %2 : i32, i32, i32
  }
  func.func @transform_3(%arg0: i32, %arg1: i32, %arg2: i32) -> (i32, i32, i32) {
    %c0_i32 = arith.constant 0 : i32
    %c0_i32_0 = arith.constant 0 : i32
    %c0_i32_1 = arith.constant 0 : i32
    return %arg0, %c0_i32, %c0_i32_0 : i32, i32, i32
  }
  func.func @transform_4(%arg0: i32, %arg1: i32, %arg2: i32) -> (i32, i32, i32) {
    %c0_i32 = arith.constant 0 : i32
    %c0_i32_0 = arith.constant 0 : i32
    %c0_i32_1 = arith.constant 0 : i32
    return %arg0, %c0_i32, %c0_i32_0 : i32, i32, i32
  }
}

</mosaic_0001>

<llo_original>
// kernel: tpu_custom_call.1
$region0: #{tpu_custom_call.1}
  #allocation0 [shape = 'u32[]', space=smem, size = 0x4, offset = 0x4, fixed_abs, tag = 'smem constant byte address 0x4 - core index']
  #allocation1 [shape = 'u32[72,128]{1,0:T(1,128)}', space=vmem, size = 0x9000, scoped, tag = 'internal scratch']
  %s0 = inlined_call_operand.hbm [shape: f32[2,4,16], index: 0, kind: input, shape index: {}]
  %s1 = inlined_call_operand.hbm [shape: bf16[4,4], index: 1, kind: input, shape index: {}]
  %s2 = inlined_call_operand.hbm [shape: bf16[2,4,16], index: 2, kind: output, shape index: {0}]
  %s3 = inlined_call_operand.vmem [shape: f32[1,4,1], index: 3, kind: output, shape index: {1}]
  %s4 = inlined_call_operand.vmem [shape: f32[1,4,1], index: 4, kind: output, shape index: {2}]
  %5 = xla_tuple %s2, %s3, %s4
  %s6 = sld [smem:[#allocation0]]
  $region46: #{tpu_custom_call.1} parent=0
    _
  %s8 = ssub.s32 1, %s6
  %s9 = scalar_select 0, %s8, %s6
  $region1: #{tpu_custom_call.1} parent=0
    #allocation2 [shape = 'u8[4096]{0}', space=vmem, size = 0x1000, scoped, tag = 'input window, operand 0, single buffered']
    #allocation3 [shape = 's32[1]{0}', space=sflag, size = 0x4, scoped, tag = 'scoped memory for tpu_custom_call.1']
    #allocation4 [shape = 's32[1]{0}', space=sflag, size = 0x4, scoped, tag = 'scoped memory for tpu_custom_call.1']
    #allocation5 [shape = 'u8[1024]{0}', space=vmem, size = 0x400, scoped, tag = 'input window, operand 1, single buffered']
    #allocation6 [shape = 's32[1]{0}', space=sflag, size = 0x4, scoped, tag = 'scoped memory for tpu_custom_call.1']
    #allocation7 [shape = 'u8[2048]{0}', space=vmem, size = 0x800, scoped, tag = 'output window, operand 0, single buffered']
    %10 = vsyncpa [#allocation3], 0
    %11 = vsyncpa [#allocation6], 0
    %12 = vsyncpa [#allocation4], 0
    // Predicated region
    $region2: #{tpu_custom_call.1} parent=1 // pred_check
      _
    $region3: #{tpu_custom_call.1} parent=1 // pred_check_branch
      %14 = sbr.rel (0) target = $region5
    $region4: #{tpu_custom_call.1} parent=1 // pred_region
      %s15 = sadd.s32 0, 0
      %p16 = scmp.lt.s32.totalorder %s15, 0
      %s17 = scalar_select %p16, %s15, 0
      %19 = vsyncadd [#allocation3], 0
      %s20 = smul.addr %s17, 4
      %s21 = scalar_lea.hbm %s0, %s20
      %s22 = sshll.u32 %s21, 4
      %s23 = int_to_ptr.hbm [resolvable:$true] %s22
      %s24 = sshll.u32 [#allocation2], 4
      %s25 = int_to_ptr.vmem [resolvable:$true] %s24
      %30 = dma.hbm_to_vmem [thread:$0]  %s23, 128, %s25, [#allocation3], 64, 64, 4
    $region5: #{tpu_custom_call.1} parent=1 // pred_fallthru
      _
    // Predicated region
    $region6: #{tpu_custom_call.1} parent=1 // pred_check
      _
    $region7: #{tpu_custom_call.1} parent=1 // pred_check_branch
      %32 = sbr.rel (0) target = $region9
    $region8: #{tpu_custom_call.1} parent=1 // pred_region
      %34 = vsyncadd [#allocation6], 0
      %s36 = sshll.u32 %s1, 4
      %s37 = int_to_ptr.hbm [resolvable:$true] %s36
      %s38 = sshll.u32 [#allocation5], 4
      %s39 = int_to_ptr.vmem [resolvable:$true] %s38
      %41 = dma.hbm_to_vmem [thread:$0]  %s37, 32, %s39, [#allocation6]
    $region9: #{tpu_custom_call.1} parent=1 // pred_fallthru
      _
    // Predicated region
    $region10: #{tpu_custom_call.1} parent=1 // pred_check
      _
    $region11: #{tpu_custom_call.1} parent=1 // pred_check_branch
      %43 = sbr.rel (0) target = $region13
    $region12: #{tpu_custom_call.1} parent=1 // pred_region
      %45 = dma.done [#allocation3], 128
    $region13: #{tpu_custom_call.1} parent=1 // pred_fallthru
      _
    // Predicated region
    $region14: #{tpu_custom_call.1} parent=1 // pred_check
      _
    $region15: #{tpu_custom_call.1} parent=1 // pred_check_branch
      %47 = sbr.rel (0) target = $region17
    $region16: #{tpu_custom_call.1} parent=1 // pred_region
      %49 = dma.done [#allocation6], 32
    $region17: #{tpu_custom_call.1} parent=1 // pred_fallthru
      _
    %s50 = sadd.s32 0, 0
    %p51 = scmp.lt.s32.totalorder %s50, 0
    %s52 = scalar_select %p51, %s50, 0
    %s53 = sadd.s32 0, 0
    %p54 = scmp.lt.s32.totalorder %s53, 0
    %s55 = scalar_select %p54, %s53, 0
    %p57 = scmp.eq.s32.totalorder 0, 0
    %p58 = scmp.eq.s32.totalorder 0, 0
    %p59 = pnand %p57, %p58
    %p60 = pneg %p59
    // Predicated region
    $region18: #{tpu_custom_call.1} parent=1 // pred_check
      _
    $region19: #{tpu_custom_call.1} parent=1 // pred_check_branch
      %62 = sbr.rel (%p59) target = $region21
    $region20: #{tpu_custom_call.1} parent=1 // pred_region
      %vm63 = vcmask 3072
      %64 = vst.msk [vmem:[%s3] sm:$0xf] %vm63, 0.0
      %65 = vst.msk [vmem:[%s4] sm:$0xf] %vm63, 0.0
    $region21: #{tpu_custom_call.1} parent=1 // pred_fallthru
      _
    %v66 = vld [vmem:[#allocation5] sm:$0x3]
    %v67 = vld [vmem:[#allocation2] sm:$0xf]
    %v68 = vpack.c.bf16 %v67, %v67
    %vm69 = vcmask 123904
    %70 = vst.msk [vmem:[#allocation7] sm:$0x3] %vm69, %v68
    %vm71 = vcmask 31744
    %v73 = vsel %vm71, %v66, 0
    %vm75 = vcmask 1041408
    %v77 = vsel %vm75, %v68, 0
    %79 = vmatpush.bf16.msra.mxu0 0
    %80 = vmatpush.bf16.msra.mxu0 0
    %81 = vmatpush.bf16.msra.mxu0 0
    %82 = vmatpush.bf16.msra.mxu0 0
    %83 = vmatpush.bf16.msra.mxu0 0
    %84 = vmatpush.bf16.msra.mxu0 0
    %85 = vmatpush.bf16.msra.mxu0 0
    %86 = vmatpush.bf16.msra.mxu0 %v77
    %87 = vmatmul.bf16.gmra.mxu0 %v73
    %v88 = vpop.f32.mrf.mxu0
    %v89 = vadd.f32 0.0, %v88
    %v90 = vpop.f32.mrf.mxu0
    %91 = vdwg.mxu0
    %vm92 = vcmask 125952
    %v93 = vsel %vm92, %v89, 0.0
    %94 = vadd.xlane.f32.xlu0 %v93
    %v95 = vpop.xlane.xlu0 %94
    %v96 = vadd.f32 %v95, 0.0
    %v97 = vmul.f32 %v89, %v89
    %v98 = vsel %vm92, %v97, 0.0
    %99 = vadd.xlane.f32.xlu0 %v98
    %v100 = vpop.xlane.xlu0 %99
    %v101 = vadd.f32 %v100, 0.0
    %s102 = scalar_lea.vmem [#allocation2], 4
    %v103 = vld [vmem:[%s102] sm:$0xf]
    %v104 = vpack.c.bf16 %v103, %v103
    %s105 = scalar_lea.vmem [#allocation7], 2
    %106 = vst.msk [vmem:[%s105] sm:$0x3] %vm69, %v104
    %v108 = vsel %vm75, %v104, 0
    %110 = vmatpush.bf16.msra.mxu0 0
    %111 = vmatpush.bf16.msra.mxu0 0
    %112 = vmatpush.bf16.msra.mxu0 0
    %113 = vmatpush.bf16.msra.mxu0 0
    %114 = vmatpush.bf16.msra.mxu0 0
    %115 = vmatpush.bf16.msra.mxu0 0
    %116 = vmatpush.bf16.msra.mxu0 0
    %117 = vmatpush.bf16.msra.mxu0 %v108
    %118 = vmatmul.bf16.gmra.mxu0 %v73
    %v119 = vpop.f32.mrf.mxu0
    %v120 = vadd.f32 0.0, %v119
    %v121 = vpop.f32.mrf.mxu0
    %122 = vdwg.mxu0
    %v123 = vsel %vm92, %v120, 0.0
    %124 = vadd.xlane.f32.xlu0 %v123
    %v125 = vpop.xlane.xlu0 %124
    %v126 = vadd.f32 %v96, %v125
    %v127 = vmul.f32 %v120, %v120
    %v128 = vsel %vm92, %v127, 0.0
    %129 = vadd.xlane.f32.xlu0 %v128
    %v130 = vpop.xlane.xlu0 %129
    %v131 = vadd.f32 %v101, %v130
    %v132 = vld [vmem:[%s3] sm:$0xf]
    %v133 = vadd.f32 %v132, %v126
    %vm134 = vcmask 3072
    %135 = vst.msk [vmem:[%s3] sm:$0xf] %vm134, %v133
    %v136 = vld [vmem:[%s4] sm:$0xf]
    %v137 = vadd.f32 %v136, %v131
    %138 = vst.msk [vmem:[%s4] sm:$0xf] %vm134, %v137
    // Predicated region
    $region22: #{tpu_custom_call.1} parent=1 // pred_check
      _
    $region23: #{tpu_custom_call.1} parent=1 // pred_check_branch
      %140 = sbr.rel (0) target = $region25
    $region24: #{tpu_custom_call.1} parent=1 // pred_region
      %s141 = sadd.s32 0, 0
      %p142 = scmp.lt.s32.totalorder %s141, 0
      %s143 = scalar_select %p142, %s141, 0
      %145 = vsyncadd [#allocation4], 0
      %s146 = smul.addr %s143, 2
      %s147 = scalar_lea.hbm %s2, %s146
      %s148 = sshll.u32 [#allocation7], 4
      %s149 = int_to_ptr.vmem [resolvable:$true] %s148
      %s150 = sshll.u32 %s147, 4
      %s151 = int_to_ptr.hbm [resolvable:$true] %s150
      %156 = dma.vmem_to_hbm [thread:$0]  %s149, 64, %s151, [#allocation4], 32, 32, 2
    $region25: #{tpu_custom_call.1} parent=1 // pred_fallthru
      _
    // Predicated region
    $region26: #{tpu_custom_call.1} parent=1 // pred_check
      _
    $region27: #{tpu_custom_call.1} parent=1 // pred_check_branch
      %158 = sbr.rel (0) target = $region29
    $region28: #{tpu_custom_call.1} parent=1 // pred_region
      _
    $region29: #{tpu_custom_call.1} parent=1 // pred_fallthru
      _
    // Predicated region
    $region30: #{tpu_custom_call.1} parent=1 // pred_check
      _
    $region31: #{tpu_custom_call.1} parent=1 // pred_check_branch
      %160 = sbr.rel (0) target = $region33
    $region32: #{tpu_custom_call.1} parent=1 // pred_region
      _
    $region33: #{tpu_custom_call.1} parent=1 // pred_fallthru
      _
    // Predicated region
    $region34: #{tpu_custom_call.1} parent=1 // pred_check
      _
    $region35: #{tpu_custom_call.1} parent=1 // pred_check_branch
      %162 = sbr.rel (0) target = $region37
    $region36: #{tpu_custom_call.1} parent=1 // pred_region
      %164 = dma.done [#allocation4], 64
    $region37: #{tpu_custom_call.1} parent=1 // pred_fallthru
      _
    // Predicated region
    $region38: #{tpu_custom_call.1} parent=1 // pred_check
      _
    $region39: #{tpu_custom_call.1} parent=1 // pred_check_branch
      %166 = sbr.rel (0) target = $region41
    $region40: #{tpu_custom_call.1} parent=1 // pred_region
      _
    $region41: #{tpu_custom_call.1} parent=1 // pred_fallthru
      _
    // Predicated region
    $region42: #{tpu_custom_call.1} parent=1 // pred_check
      _
    $region43: #{tpu_custom_call.1} parent=1 // pred_check_branch
      %168 = sbr.rel (0) target = $region45
    $region44: #{tpu_custom_call.1} parent=1 // pred_region
      _
    $region45: #{tpu_custom_call.1} parent=1 // pred_fallthru
      _
    %169 = vsyncpa [#allocation3], 1
    %170 = vsyncpa [#allocation6], 1
    %171 = vsyncpa [#allocation4], 1

</llo_original>
